<compile_context>
chip_gen: v6e
topology: v6e:2x2x1
jax: 0.10.0
libtpu: 0.0.40
codegen_flags: <defaults>
</compile_context>

<pallas_src>
import jax
import jax.numpy as jnp
from jax import lax
from jax.experimental import pallas as pl
from jax.experimental.pallas import tpu as pltpu

TV_WEIGHT = 0.1  # deterministic "parameter" of the GraphTV regularizer


def _vmem_limit_bytes():
    """Scoped-VMEM request sized against the actual chip (v7x only has 64 MiB)."""
    try:
        cap = int(pltpu.get_tpu_info().vmem_capacity_bytes)
    except Exception:
        cap = 64 * 1024 * 1024
    return int(min(cap * 3 // 4, 100 * 1024 * 1024))


def _choose_rows_per_tile(H, W, per_row_bytes, budget_bytes, lane_cap=8 * 1024):
    """Rows of the folded (H, W) grid per tile.

    `per_row_bytes` counts BOTH the double-buffered input DMA blocks AND the
    f32 working set the body materializes, so the chosen tile cannot blow the
    scoped-VMEM limit (v7x has only 64 MiB per TensorCore).  Tiles are also
    capped at `lane_cap` lanes: the HBM roofline saturates well below that,
    and smaller tiles keep enough grid steps to overlap DMA with compute.
    """
    cands = [th for th in range(1, H + 1)
             if H % th == 0 and (th == H or (th * W) % 128 == 0)]
    fitting = [th for th in cands if th * per_row_bytes <= budget_bytes]
    if not fitting:
        raise ValueError(
            f"CrossEntropy_with_GraphTVLoss kernel: no lane-aligned row tiling "
            f"of H={H}, W={W} fits the VMEM budget ({budget_bytes} bytes); "
            f"pass rows_per_tile explicitly or shrink the inputs.")
    capped = [th for th in fitting if th * W <= lane_cap]
    return max(capped) if capped else min(fitting)


def _make_kernel(*, num_classes, W, THW, n_t, ce_coef, dh_coef, dw_coef,
                 shared, use_mxu_cls, use_mxu_feat, exp_in_bf16):
    """Fused CE + GraphTV body for one (batch, row-tile) grid point."""

    def csum(v, on_mxu):
        # Channel/class (sublane) reduction.  For larger channel counts, ride
        # the otherwise idle MXU (ones-vector matmul) so XLU/VPU slots stay
        # free; HIGHEST precision keeps f32-level accuracy.
        if on_mxu:
            ones = jnp.ones((1, v.shape[0]), jnp.float32)
            return jnp.dot(ones, v, precision=lax.Precision.HIGHEST,
                           preferred_element_type=jnp.float32)
        return jnp.sum(v, axis=0, keepdims=True)

    def body(x_ref, tgt_ref, f_ref, out_ref, acc_ref, mw_ref, mh_ref, carry_ref):
        t = pl.program_id(1)

        x = x_ref[0].astype(jnp.float32)                      # (C, THW)
        tgt = tgt_ref[0].astype(jnp.int32)                    # (1, THW)
        f = x if shared else f_ref[0].astype(jnp.float32)     # (Cf, THW)

        # ---- once per batch element: zero the accumulator, build the lane
        # masks (TV coefficients folded in), seed the row carry --------------
        @pl.when(t == 0)
        def _init():
            acc_ref[...] = jnp.zeros_like(acc_ref)
            lane = lax.broadcasted_iota(jnp.int32, (1, THW), 1)
            mw_ref[...] = jnp.where(lane % W != 0, dw_coef, 0.0).astype(jnp.float32)
            mh_ref[...] = jnp.where(lane >= W, dh_coef, 0.0).astype(jnp.float32)
            if n_t > 1:
                # Seeding with the tile's own first row makes the boundary
                # term exactly zero on the first tile: no (t>0) gating and no
                # reads of uninitialized scratch.
                carry_ref[...] = f[:, :W]

        # ---- cross entropy (one-hot free: iota compare on the class axis) --
        cls = lax.broadcasted_iota(jnp.int32, (num_classes, THW), 0)
        sel = csum(jnp.where(cls == tgt, x, 0.0), use_mxu_cls)   # (1, THW)
        xmax = jnp.max(x, axis=0, keepdims=True)                 # (1, THW)
        xs = x - xmax
        if exp_in_bf16:
            # EUP relief on v6e/v7x (bf16 EUP ~2x f32); the sum stays in f32.
            e = jnp.exp(xs.astype(jnp.bfloat16)).astype(jnp.float32)
        else:
            e = jnp.exp(xs)
        lse = jnp.log(csum(e, use_mxu_cls)) + xmax               # (1, THW)

        # ---- graph TV: backward diffs via XLU rolls -------------------------
        left = pltpu.roll(f, shift=1, axis=1)                    # left[i] = f[i-1]
        up = pltpu.roll(f, shift=W, axis=1)                      # up[i]   = f[i-W]
        dw_lane = csum(jnp.abs(f - left), use_mxu_feat)          # (1, THW)
        dh_lane = csum(jnp.abs(f - up), use_mxu_feat)            # (1, THW)

        # ---- one fused per-lane partial, accumulated in VMEM scratch --------
        per_lane = (ce_coef * (lse - sel)
                    + mw_ref[...] * dw_lane + mh_ref[...] * dh_lane)
        acc_ref[...] += per_lane

        if n_t > 1:
            # Cross-row-tile boundary: previous tile's last feature row is
            # carried in VMEM scratch (no extra HBM / halo DMA stream).
            prev = carry_ref[...]                                # (Cf, W)
            bnd = jnp.sum(jnp.abs(f[:, :W] - prev), axis=0, keepdims=True)
            acc_ref[:, :W] += dh_coef * bnd
            carry_ref[...] = f[:, THW - W:]

        # ---- single cross-lane reduction + output store, last tile only -----
        @pl.when(t == n_t - 1)
        def _fin():
            out_ref[...] = jnp.sum(acc_ref[...], axis=1, keepdims=True)[None]

    if shared:
        def kernel(x_ref, tgt_ref, out_ref, acc_ref, mw_ref, mh_ref, carry_ref):
            body(x_ref, tgt_ref, None, out_ref, acc_ref, mw_ref, mh_ref, carry_ref)
    else:
        def kernel(x_ref, tgt_ref, f_ref, out_ref, acc_ref, mw_ref, mh_ref, carry_ref):
            body(x_ref, tgt_ref, f_ref, out_ref, acc_ref, mw_ref, mh_ref, carry_ref)
    return kernel


def cross_entropy_with_graph_tv(data, target, tv_weight=TV_WEIGHT,
                                rows_per_tile=None, exp_in_bf16=False):
    """Mirror of CrossEntropy_with_GraphTVLoss.forward (mean reductions)."""
    if isinstance(data, (tuple, list)):
        x, feature = data[0], data[1]
        shared = feature is x
    else:
        x = data
        feature = data
        shared = True

    B, C, H, W = x.shape
    if shared:
        Cf = C
    else:
        Bf, Cf, Hf, Wf = feature.shape
        assert (Bf, Hf, Wf) == (B, H, W), \
            "feature must share batch/spatial dims with logits"
    HW = H * W

    # Narrow targets wrapper-side (up to ~25% of HBM bytes for small-C bf16
    # inputs); widened back to int32 inside the kernel.
    tgt_dtype = jnp.int8 if C <= 127 else jnp.int32
    tgt_itemsize = jnp.dtype(tgt_dtype).itemsize

    vmem_limit = _vmem_limit_bytes()
    c_extra = 0 if shared else Cf
    # Per-row byte model: double-buffered input DMA blocks PLUS ~4 live f32
    # temporaries per channel (x.astype(f32), exp, rolls, |diff|) and a few
    # (1, THW) f32 rows (masks / accumulator / per-lane partials).
    dma_per_row = 2 * W * (C * x.dtype.itemsize
                           + c_extra * feature.dtype.itemsize
                           + tgt_itemsize)
    work_per_row = 4 * W * (C + c_extra) * 4 + 8 * W * 4
    per_row_bytes = dma_per_row + work_per_row

    if rows_per_tile is None:
        TH = _choose_rows_per_tile(H, W, per_row_bytes, vmem_limit // 2)
    else:
        TH = int(rows_per_tile)
        assert H % TH == 0 and (TH == H or (TH * W) % 128 == 0), \
            "rows_per_tile must divide H and give a lane-aligned tile"
    THW = TH * W
    n_t = H // TH

    # Lane-dense folded views: spatial (H, W) -> H*W on the lane axis.
    x3 = x.reshape(B, C, HW)
    t3 = target.astype(tgt_dtype).reshape(B, 1, HW)

    # Mean-reduction normalizers folded into per-lane coefficients/masks.
    ce_coef = 1.0 / float(B * H * W)
    dh_coef = float(tv_weight) / float(B * Cf * (H - 1) * W) if H > 1 else 0.0
    dw_coef = float(tv_weight) / float(B * Cf * H * (W - 1)) if W > 1 else 0.0

    kernel = _make_kernel(num_classes=C, W=W, THW=THW, n_t=n_t,
                          ce_coef=ce_coef, dh_coef=dh_coef, dw_coef=dw_coef,
                          shared=shared,
                          use_mxu_cls=(C >= 16), use_mxu_feat=(Cf >= 16),
                          exp_in_bf16=exp_in_bf16)

    in_specs = [pl.BlockSpec((1, C, THW), lambda b, t: (b, 0, t)),
                pl.BlockSpec((1, 1, THW), lambda b, t: (b, 0, t))]
    inputs = [x3, t3]
    if not shared:
        f3 = feature.reshape(B, Cf, HW)
        in_specs.append(pl.BlockSpec((1, Cf, THW), lambda b, t: (b, 0, t)))
        inputs.append(f3)

    scratch_shapes = [
        pltpu.VMEM((1, THW), jnp.float32),   # fused per-lane loss accumulator
        pltpu.VMEM((1, THW), jnp.float32),   # dw lane mask (dw_coef folded in)
        pltpu.VMEM((1, THW), jnp.float32),   # dh lane mask (dh_coef folded in)
        pltpu.VMEM((Cf, W), jnp.float32),    # last-row carry across row tiles
    ]

    bytes_accessed = (x3.size * x3.dtype.itemsize
                      + t3.size * t3.dtype.itemsize
                      + (0 if shared else f3.size * f3.dtype.itemsize)
                      + B * 4)
    cost = pl.CostEstimate(
        flops=int(8 * B * C * HW + 10 * B * Cf * HW),
        transcendentals=int(B * C * HW + B * HW),
        bytes_accessed=int(bytes_accessed))

    # TODO(synk): on v7x (2 TensorCores, 64 MiB VMEM each) switch the batch
    # axis to pltpu.CORE_PARALLEL (or an explicit core axis via pl.core_map)
    # with per-core partial sums; plain "parallel" does not split the grid
    # across TensorCores on its own.
    partial = pl.pallas_call(
        kernel,
        grid=(B, n_t),
        in_specs=in_specs,
        out_specs=pl.BlockSpec((1, 1, 1), lambda b, t: (b, 0, 0)),
        out_shape=jax.ShapeDtypeStruct((B, 1, 1), jnp.float32),
        scratch_shapes=scratch_shapes,
        compiler_params=pltpu.CompilerParams(
            dimension_semantics=("parallel", "arbitrary"),
            vmem_limit_bytes=vmem_limit),
        cost_estimate=cost,
    )(*inputs)
    return jnp.sum(partial)


def _reference(data, target, tv_weight=TV_WEIGHT):
    """Pure-JAX reference matching the defined semantics."""
    if isinstance(data, (tuple, list)):
        x, feature = data[0], data[1]
    else:
        x = feature = data
    logp = jax.nn.log_softmax(x.astype(jnp.float32), axis=1)
    oh = jax.nn.one_hot(target, x.shape[1], axis=1, dtype=jnp.float32)
    ce = -jnp.mean(jnp.sum(oh * logp, axis=1))
    f = feature.astype(jnp.float32)
    dh = jnp.abs(f[:, :, 1:, :] - f[:, :, :-1, :])
    dw = jnp.abs(f[:, :, :, 1:] - f[:, :, :, :-1])
    tv = tv_weight * (jnp.mean(dh) + jnp.mean(dw))
    return ce + tv


if __name__ == "__main__":
    key = jax.random.PRNGKey(0)
    k1, k2, k3, k4, k5, k6 = jax.random.split(key, 6)

    B, C, H, W = 2, 4, 16, 16   # logits: [B, num_classes, H, W]
    CF = 8                      # feature channels

    logits = jax.random.normal(k1, (B, C, H, W), dtype=jnp.float32)
    feature = jax.random.normal(k2, (B, CF, H, W), dtype=jnp.float32)
    target = jax.random.randint(k3, (B, H, W), 0, C, dtype=jnp.int32)

    ref = _reference((logits, feature), target)

    # 1) tuple path, auto tiling
    loss = jax.block_until_ready(cross_entropy_with_graph_tv((logits, feature), target))
    assert jnp.allclose(loss, ref, rtol=1e-4, atol=1e-5), (float(loss), float(ref))

    # 2) tuple path, forced row tiling (exercises the VMEM-carried boundary row)
    loss_t = jax.block_until_ready(
        cross_entropy_with_graph_tv((logits, feature), target, rows_per_tile=8))
    assert jnp.allclose(loss_t, ref, rtol=1e-4, atol=1e-5), (float(loss_t), float(ref))

    # 3) non-tuple path: feature == logits, single HBM stream (shared kernel)
    ref_s = _reference(logits, target)
    loss_s = jax.block_until_ready(cross_entropy_with_graph_tv(logits, target))
    assert jnp.allclose(loss_s, ref_s, rtol=1e-4, atol=1e-5), (float(loss_s), float(ref_s))

    # 4) shared path with forced tiling (shared + carry variant)
    loss_sh = jax.block_until_ready(
        cross_entropy_with_graph_tv(logits, target, rows_per_tile=8))
    assert jnp.allclose(loss_sh, ref_s, rtol=1e-4, atol=1e-5), (float(loss_sh), float(ref_s))

    # 5) bf16 ingestion: cast to f32 inside the kernel, not in the wrapper
    logits_bf = logits.astype(jnp.bfloat16)
    feature_bf = feature.astype(jnp.bfloat16)
    ref_bf = _reference((logits_bf, feature_bf), target)
    loss_bf = jax.block_until_ready(
        cross_entropy_with_graph_tv((logits_bf, feature_bf), target, rows_per_tile=8))
    assert jnp.allclose(loss_bf, ref_bf, rtol=2e-3, atol=2e-3), (float(loss_bf), float(ref_bf))

    # 6) larger channel counts: class/channel reductions ride the idle MXU
    C2, CF2 = 32, 32
    logits2 = jax.random.normal(k4, (1, C2, H, W), dtype=jnp.float32)
    feature2 = jax.random.normal(k5, (1, CF2, H, W), dtype=jnp.float32)
    target2 = jax.random.randint(k6, (1, H, W), 0, C2, dtype=jnp.int32)
    ref2 = _reference((logits2, feature2), target2)
    loss2 = jax.block_until_ready(
        cross_entropy_with_graph_tv((logits2, feature2), target2))
    assert jnp.allclose(loss2, ref2, rtol=2e-4, atol=1e-4), (float(loss2), float(ref2))

    print("KERNEL_OK")
</pallas_src>

<mosaic_0001>
module attributes {stable_mosaic.version = 11 : i64} {
  func.func @kernel(%arg0: i32, %arg1: i32, %arg2: memref<1x4x256xf32, #tpu.memory_space<vmem>>, %arg3: memref<1x1x256xi8, #tpu.memory_space<vmem>>, %arg4: memref<1x8x256xf32, #tpu.memory_space<vmem>>, %arg5: memref<1x1x1xf32, #tpu.memory_space<vmem>>, %arg6: memref<1x256xf32, #tpu.memory_space<vmem>>, %arg7: memref<1x256xf32, #tpu.memory_space<vmem>>, %arg8: memref<1x256xf32, #tpu.memory_space<vmem>>, %arg9: memref<8x16xf32, #tpu.memory_space<vmem>>) attributes {dimension_semantics = [#tpu.dimension_semantics<parallel>, #tpu.dimension_semantics<arbitrary>], iteration_bounds = array<i64: 2, 1>, scalar_prefetch = 0 : i64, scratch_operands = 4 : i64, tpu.core_type = #tpu.core_type<tc>, window_params = [{transform_indices = @transform_0, window_bounds = array<i64: 1, 4, 256>}, {transform_indices = @transform_1, window_bounds = array<i64: 1, 1, 256>}, {transform_indices = @transform_2, window_bounds = array<i64: 1, 8, 256>}, {transform_indices = @transform_3, window_bounds = array<i64: 1, 1, 1>}]} {
    %c0 = arith.constant 0 : index
    %c0_0 = arith.constant 0 : index
    %c0_1 = arith.constant 0 : index
    %0 = vector.load %arg2[%c0, %c0_0, %c0_1] : memref<1x4x256xf32, #tpu.memory_space<vmem>>, vector<1x4x256xf32>
    %1 = vector.shape_cast %0 : vector<1x4x256xf32> to vector<4x256xf32>
    %c0_2 = arith.constant 0 : index
    %c0_3 = arith.constant 0 : index
    %c0_4 = arith.constant 0 : index
    %2 = vector.load %arg3[%c0_2, %c0_3, %c0_4] : memref<1x1x256xi8, #tpu.memory_space<vmem>>, vector<1x1x256xi8>
    %3 = vector.shape_cast %2 : vector<1x1x256xi8> to vector<1x256xi8>
    %4 = arith.extsi %3 : vector<1x256xi8> to vector<1x256xi32>
    %c0_5 = arith.constant 0 : index
    %c0_6 = arith.constant 0 : index
    %c0_7 = arith.constant 0 : index
    %5 = vector.load %arg4[%c0_5, %c0_6, %c0_7] : memref<1x8x256xf32, #tpu.memory_space<vmem>>, vector<1x8x256xf32>
    %6 = vector.shape_cast %5 : vector<1x8x256xf32> to vector<8x256xf32>
    %c0_i32 = arith.constant 0 : i32
    %7 = arith.cmpi eq, %arg1, %c0_i32 : i32
    %8 = arith.extui %7 : i1 to i32
    %c0_i32_8 = arith.constant 0 : i32
    %9 = arith.cmpi ne, %8, %c0_i32_8 : i32
    scf.if %9 {
      %cst_25 = arith.constant 0.000000e+00 : f32
      %51 = vector.broadcast %cst_25 : f32 to vector<1x256xf32>
      %c0_26 = arith.constant 0 : index
      %c0_27 = arith.constant 0 : index
      %52 = vector.load %arg6[%c0_26, %c0_27] : memref<1x256xf32, #tpu.memory_space<vmem>>, vector<1x256xf32>
      tpu.vector_store %arg6[%c0_26, %c0_27], %51 {strides = array<i32>} : memref<1x256xf32, #tpu.memory_space<vmem>>, vector<1x256xf32>,
      %53 = tpu.iota {dimensions = array<i32: 1>} : vector<1x256xi32>
      %c16_i32_28 = arith.constant 16 : i32
      %c0_i32_29 = arith.constant 0 : i32
      %54 = arith.cmpi eq, %c16_i32_28, %c0_i32_29 : i32
      %c1_i32_30 = arith.constant 1 : i32
      %55 = arith.select %54, %c1_i32_30, %c16_i32_28 : i32
      %56 = vector.broadcast %55 : i32 to vector<1x256xi32>
      %57 = arith.remsi %53, %56 : vector<1x256xi32>
      %c0_i32_31 = arith.constant 0 : i32
      %58 = vector.broadcast %c0_i32_31 : i32 to vector<1x256xi32>
      %59 = arith.cmpi ne, %57, %58 : vector<1x256xi32>
      %c0_i32_32 = arith.constant 0 : i32
      %60 = vector.broadcast %c0_i32_32 : i32 to vector<1x256xi32>
      %61 = arith.cmpi slt, %57, %60 : vector<1x256xi32>
      %c0_i32_33 = arith.constant 0 : i32
      %62 = arith.cmpi slt, %55, %c0_i32_33 : i32
      %63 = vector.broadcast %62 : i1 to vector<1x256xi1>
      %64 = vector.broadcast %63 : vector<1x256xi1> to vector<1x256xi1>
      %65 = arith.xori %61, %64 : vector<1x256xi1>
      %66 = arith.andi %65, %59 : vector<1x256xi1>
      %67 = vector.broadcast %55 : i32 to vector<1x256xi32>
      %68 = arith.addi %57, %67 : vector<1x256xi32>
      %69 = arith.select %66, %68, %57 : vector<1x256xi1>, vector<1x256xi32>
      %c0_i32_34 = arith.constant 0 : i32
      %70 = vector.broadcast %c0_i32_34 : i32 to vector<1x256xi32>
      %71 = arith.cmpi ne, %69, %70 : vector<1x256xi32>
      %cst_35 = arith.constant 2.60416673E-5 : f32
      %cst_36 = arith.constant 0.000000e+00 : f32
      %72 = vector.broadcast %cst_35 : f32 to vector<1x256xf32>
      %73 = vector.broadcast %cst_36 : f32 to vector<1x256xf32>
      %74 = arith.select %71, %72, %73 : vector<1x256xi1>, vector<1x256xf32>
      %c0_37 = arith.constant 0 : index
      %c0_38 = arith.constant 0 : index
      %75 = vector.load %arg7[%c0_37, %c0_38] : memref<1x256xf32, #tpu.memory_space<vmem>>, vector<1x256xf32>
      tpu.vector_store %arg7[%c0_37, %c0_38], %74 {strides = array<i32>} : memref<1x256xf32, #tpu.memory_space<vmem>>, vector<1x256xf32>,
      %c16_i32_39 = arith.constant 16 : i32
      %76 = vector.broadcast %c16_i32_39 : i32 to vector<1x256xi32>
      %77 = arith.cmpi sge, %53, %76 : vector<1x256xi32>
      %cst_40 = arith.constant 2.60416673E-5 : f32
      %cst_41 = arith.constant 0.000000e+00 : f32
      %78 = vector.broadcast %cst_40 : f32 to vector<1x256xf32>
      %79 = vector.broadcast %cst_41 : f32 to vector<1x256xf32>
      %80 = arith.select %77, %78, %79 : vector<1x256xi1>, vector<1x256xf32>
      %c0_42 = arith.constant 0 : index
      %c0_43 = arith.constant 0 : index
      %81 = vector.load %arg8[%c0_42, %c0_43] : memref<1x256xf32, #tpu.memory_space<vmem>>, vector<1x256xf32>
      tpu.vector_store %arg8[%c0_42, %c0_43], %80 {strides = array<i32>} : memref<1x256xf32, #tpu.memory_space<vmem>>, vector<1x256xf32>,
    } else {
    }
    %10 = tpu.iota {dimensions = array<i32: 0>} : vector<4x256xi32>
    %11 = vector.broadcast %4 : vector<1x256xi32> to vector<4x256xi32>
    %12 = arith.cmpi eq, %10, %11 : vector<4x256xi32>
    %cst = arith.constant 0.000000e+00 : f32
    %13 = vector.broadcast %cst : f32 to vector<4x256xf32>
    %14 = arith.select %12, %1, %13 : vector<4x256xi1>, vector<4x256xf32>
    %cst_9 = arith.constant dense<0.000000e+00> : vector<256xf32>
    %15 = vector.multi_reduction <add>, %14, %cst_9 [0] : vector<4x256xf32> to vector<256xf32>
    %16 = vector.shape_cast %15 : vector<256xf32> to vector<1x256xf32>
    %cst_10 = arith.constant dense<0xFF800000> : vector<256xf32>
    %17 = vector.multi_reduction <maximumf>, %1, %cst_10 [0] : vector<4x256xf32> to vector<256xf32>
    %18 = vector.shape_cast %17 : vector<256xf32> to vector<1x256xf32>
    %19 = vector.broadcast %18 : vector<1x256xf32> to vector<4x256xf32>
    %20 = arith.subf %1, %19 : vector<4x256xf32>
    %21 = math.exp %20 : vector<4x256xf32>
    %cst_11 = arith.constant dense<0.000000e+00> : vector<256xf32>
    %22 = vector.multi_reduction <add>, %21, %cst_11 [0] : vector<4x256xf32> to vector<256xf32>
    %23 = vector.shape_cast %22 : vector<256xf32> to vector<1x256xf32>
    %24 = math.log %23 : vector<1x256xf32>
    %25 = arith.addf %24, %18 : vector<1x256xf32>
    %c1_i32 = arith.constant 1 : i32
    %26 = tpu.dynamic_rotate %6 by %c1_i32 dim 1 : vector<8x256xf32>, i32 -> vector<8x256xf32>
    %c16_i32 = arith.constant 16 : i32
    %27 = tpu.dynamic_rotate %6 by %c16_i32 dim 1 : vector<8x256xf32>, i32 -> vector<8x256xf32>
    %28 = arith.subf %6, %26 : vector<8x256xf32>
    %29 = math.absf %28 : vector<8x256xf32>
    %cst_12 = arith.constant dense<0.000000e+00> : vector<256xf32>
    %30 = vector.multi_reduction <add>, %29, %cst_12 [0] : vector<8x256xf32> to vector<256xf32>
    %31 = vector.shape_cast %30 : vector<256xf32> to vector<1x256xf32>
    %32 = arith.subf %6, %27 : vector<8x256xf32>
    %33 = math.absf %32 : vector<8x256xf32>
    %cst_13 = arith.constant dense<0.000000e+00> : vector<256xf32>
    %34 = vector.multi_reduction <add>, %33, %cst_13 [0] : vector<8x256xf32> to vector<256xf32>
    %35 = vector.shape_cast %34 : vector<256xf32> to vector<1x256xf32>
    %36 = arith.subf %25, %16 : vector<1x256xf32>
    %cst_14 = arith.constant 0.001953125 : f32
    %37 = vector.broadcast %cst_14 : f32 to vector<1x256xf32>
    %38 = arith.mulf %37, %36 : vector<1x256xf32>
    %c0_15 = arith.constant 0 : index
    %c0_16 = arith.constant 0 : index
    %39 = vector.load %arg7[%c0_15, %c0_16] : memref<1x256xf32, #tpu.memory_space<vmem>>, vector<1x256xf32>
    %40 = arith.mulf %39, %31 : vector<1x256xf32>
    %41 = arith.addf %38, %40 : vector<1x256xf32>
    %c0_17 = arith.constant 0 : index
    %c0_18 = arith.constant 0 : index
    %42 = vector.load %arg8[%c0_17, %c0_18] : memref<1x256xf32, #tpu.memory_space<vmem>>, vector<1x256xf32>
    %43 = arith.mulf %42, %35 : vector<1x256xf32>
    %44 = arith.addf %41, %43 : vector<1x256xf32>
    %c0_19 = arith.constant 0 : index
    %c0_20 = arith.constant 0 : index
    %45 = vector.load %arg6[%c0_19, %c0_20] : memref<1x256xf32, #tpu.memory_space<vmem>>, vector<1x256xf32>
    %46 = arith.addf %45, %44 : vector<1x256xf32>
    %c0_21 = arith.constant 0 : index
    %c0_22 = arith.constant 0 : index
    %47 = vector.load %arg6[%c0_21, %c0_22] : memref<1x256xf32, #tpu.memory_space<vmem>>, vector<1x256xf32>
    tpu.vector_store %arg6[%c0_21, %c0_22], %46 {strides = array<i32>} : memref<1x256xf32, #tpu.memory_space<vmem>>, vector<1x256xf32>,
    %c0_i32_23 = arith.constant 0 : i32
    %48 = arith.cmpi eq, %arg1, %c0_i32_23 : i32
    %49 = arith.extui %48 : i1 to i32
    %c0_i32_24 = arith.constant 0 : i32
    %50 = arith.cmpi ne, %49, %c0_i32_24 : i32
    scf.if %50 {
      %c0_25 = arith.constant 0 : index
      %c0_26 = arith.constant 0 : index
      %51 = vector.load %arg6[%c0_25, %c0_26] : memref<1x256xf32, #tpu.memory_space<vmem>>, vector<1x256xf32>
      %cst_27 = arith.constant dense<0.000000e+00> : vector<1xf32>
      %52 = vector.multi_reduction <add>, %51, %cst_27 [1] : vector<1x256xf32> to vector<1xf32>
      %53 = vector.shape_cast %52 : vector<1xf32> to vector<1x1xf32>
      %54 = vector.shape_cast %53 : vector<1x1xf32> to vector<1x1x1xf32>
      %c0_28 = arith.constant 0 : index
      %c0_29 = arith.constant 0 : index
      %c0_30 = arith.constant 0 : index
      %55 = vector.load %arg5[%c0_28, %c0_29, %c0_30] : memref<1x1x1xf32, #tpu.memory_space<vmem>>, vector<1x1x1xf32>
      tpu.vector_store %arg5[%c0_28, %c0_29, %c0_30], %54 {strides = array<i32>} : memref<1x1x1xf32, #tpu.memory_space<vmem>>, vector<1x1x1xf32>,
    } else {
    }
    return
  }
  func.func @transform_0(%arg0: i32, %arg1: i32) -> (i32, i32, i32) {
    %c0_i32 = arith.constant 0 : i32
    %c0_i32_0 = arith.constant 0 : i32
    return %arg0, %c0_i32, %arg1 : i32, i32, i32
  }
  func.func @transform_1(%arg0: i32, %arg1: i32) -> (i32, i32, i32) {
    %c0_i32 = arith.constant 0 : i32
    %c0_i32_0 = arith.constant 0 : i32
    return %arg0, %c0_i32, %arg1 : i32, i32, i32
  }
  func.func @transform_2(%arg0: i32, %arg1: i32) -> (i32, i32, i32) {
    %c0_i32 = arith.constant 0 : i32
    %c0_i32_0 = arith.constant 0 : i32
    return %arg0, %c0_i32, %arg1 : i32, i32, i32
  }
  func.func @transform_3(%arg0: i32, %arg1: i32) -> (i32, i32, i32) {
    %c0_i32 = arith.constant 0 : i32
    %c0_i32_0 = arith.constant 0 : i32
    %c0_i32_1 = arith.constant 0 : i32
    return %arg0, %c0_i32, %c0_i32_0 : i32, i32, i32
  }
}

</mosaic_0001>

<llo_original>
// kernel: tpu_custom_call.1
$region0: #{tpu_custom_call.1}
  #allocation0 [shape = 'u32[]', space=smem, size = 0x4, offset = 0x4, fixed_abs, tag = 'smem constant byte address 0x4 - core index']
  #allocation1 [shape = 'u32[144,128]{1,0:T(1,128)}', space=vmem, size = 0x12000, scoped, tag = 'internal scratch']
  #allocation2 [shape = 'f32[1,256]{1,0:T(1,128)}', space=vmem, size = 0x400, scoped, tag = 'scratch operand']
  #allocation3 [shape = 'f32[1,256]{1,0:T(1,128)}', space=vmem, size = 0x400, scoped, tag = 'scratch operand']
  #allocation4 [shape = 'f32[1,256]{1,0:T(1,128)}', space=vmem, size = 0x400, scoped, tag = 'scratch operand']
  #allocation5 [shape = 'f32[8,16]{1,0:T(8,128)}', space=vmem, size = 0x1000, scoped, tag = 'scratch operand']
  %s0 = inlined_call_operand.hbm [shape: f32[2,4,256], index: 0, kind: input, shape index: {}]
  %s1 = inlined_call_operand.vmem [shape: s8[2,1,256], index: 1, kind: input, shape index: {}]
  %s2 = inlined_call_operand.hbm [shape: f32[2,8,256], index: 2, kind: input, shape index: {}]
  %s3 = inlined_call_operand.vmem [shape: f32[2,1,1], index: 3, kind: output, shape index: {}]
  %s4 = sld [smem:[#allocation0]]
  $region61: #{tpu_custom_call.1} parent=0
    _
  %s6 = ssub.s32 1, %s4
  %s7 = scalar_select 0, %s6, %s4
  $region1: #{tpu_custom_call.1} parent=0
    #allocation6 [shape = 'u8[8192]{0}', space=vmem, size = 0x2000, scoped, tag = 'input window, operand 0']
    #allocation7 [shape = 's32[2]{0}', space=sflag, size = 0x8, scoped, tag = 'scoped memory for tpu_custom_call.1']
    #allocation8 [shape = 'u8[16384]{0}', space=vmem, size = 0x4000, scoped, tag = 'input window, operand 2']
    #allocation9 [shape = 's32[2]{0}', space=sflag, size = 0x8, scoped, tag = 'scoped memory for tpu_custom_call.1']
    %8 = vsyncpa [#allocation7], 0
    %s9 = scalar_lea.sflag [#allocation7], 1
    %10 = vsyncpa %s9, 0
    %11 = vsyncpa [#allocation9], 0
    %s12 = scalar_lea.sflag [#allocation9], 1
    %13 = vsyncpa %s12, 0
    loop: start=0, step=1, limit=4
    $region2: #{tpu_custom_call.1} parent=1 // loop_pre_header
      _
    $region3: #{tpu_custom_call.1} parent=1 // loop_header
      %s15 = sphi 0, %s19
      %p16 = scmp.ge.s32.totalorder %s15, 4
      %s22 = sphi 0, %s34
      %s23 = sphi 0, %s30
      %s24 = sphi 0, %s22
      %s25 = sphi 0, %s23
      %s26 = sphi 0, %s24
      %s27 = sphi 0, %s25
      %s39 = sphi 0, %s41
      %s42 = sphi 0, %s39
      %s43 = sphi 0, %s42
      %s59 = sphi 0, %s43
      %s67 = sphi 0, %s69
      %s70 = sphi 0, %s67
      %s71 = sphi 0, %s70
      %s87 = sphi 0, %s71
      %s95 = sphi 0, %s97
      %s98 = sphi 0, %s95
      %s99 = sphi 0, %s98
      %s115 = sphi 0, %s99
      %s121 = sphi 0, %s123
      %s124 = sphi 0, %s121
      %s125 = sphi 0, %s124
      %s141 = sphi 0, %s125
    $region4: #{tpu_custom_call.1} parent=1 // loop_header_branch
      %18 = sbr.rel (%p16) target = $region8
    $region5: #{tpu_custom_call.1} parent=1 // loop_body
      %s20 = ssub.s32 %s15, 1
      %s21 = ssub.s32 %s15, 2
      %s28 = sadd.s32 1, %s23
      %p29 = scmp.ge.s32.totalorder %s28, 1
      %s30 = scalar_select %p29, 0, %s28
      %s31 = sadd.s32 1, %s22
      %s32 = scalar_select %p29, %s31, %s22
      %p33 = scmp.ge.s32.totalorder %s32, 2
      %s34 = scalar_select %p33, 0, %s32
      %s35 = ssub.s32 %s22, %s34
      %s36 = ssub.s32 %s23, %s30
      %s37 = sor.u32 %s35, %s36
      %p38 = scmp.eq.s32.totalorder %s37, 0
      %s40 = sadd.s32 %s39, 1
      %s41 = scalar_select %p38, %s39, %s40
      %p44 = pneg %p38
      %p45 = scmp.eq.s32.totalorder %s15, 1
      %p46 = por %p44, %p45
      %p47 = scmp.ne.s32.totalorder %s39, %s42
      %p48 = scmp.eq.s32.totalorder %s15, 0
      %p49 = por %p47, %p48
      %p50 = scmp.ne.s32.totalorder %s39, %s42
      %p51 = scmp.eq.s32.totalorder %s20, 1
      %p52 = por %p50, %p51
      %p53 = scmp.ne.s32.totalorder %s42, %s43
      %p54 = scmp.eq.s32.totalorder %s20, 0
      %p55 = por %p53, %p54
      %p56 = scmp.ne.s32.totalorder %s42, %s43
      %p57 = scmp.eq.s32.totalorder %s21, 1
      %p58 = por %p56, %p57
      %p60 = scmp.ne.s32.totalorder %s43, %s59
      %p61 = scmp.eq.s32.totalorder %s21, 0
      %p62 = por %p60, %p61
      %s63 = ssub.s32 %s22, %s34
      %s64 = ssub.s32 %s23, %s30
      %s65 = sor.u32 %s63, %s64
      %p66 = scmp.eq.s32.totalorder %s65, 0
      %s68 = sadd.s32 %s67, 1
      %s69 = scalar_select %p66, %s67, %s68
      %p72 = pneg %p66
      %p73 = scmp.eq.s32.totalorder %s15, 1
      %p74 = por %p72, %p73
      %p75 = scmp.ne.s32.totalorder %s67, %s70
      %p76 = scmp.eq.s32.totalorder %s15, 0
      %p77 = por %p75, %p76
      %p78 = scmp.ne.s32.totalorder %s67, %s70
      %p79 = scmp.eq.s32.totalorder %s20, 1
      %p80 = por %p78, %p79
      %p81 = scmp.ne.s32.totalorder %s70, %s71
      %p82 = scmp.eq.s32.totalorder %s20, 0
      %p83 = por %p81, %p82
      %p84 = scmp.ne.s32.totalorder %s70, %s71
      %p85 = scmp.eq.s32.totalorder %s21, 1
      %p86 = por %p84, %p85
      %p88 = scmp.ne.s32.totalorder %s71, %s87
      %p89 = scmp.eq.s32.totalorder %s21, 0
      %p90 = por %p88, %p89
      %s91 = ssub.s32 %s22, %s34
      %s92 = ssub.s32 %s23, %s30
      %s93 = sor.u32 %s91, %s92
      %p94 = scmp.eq.s32.totalorder %s93, 0
      %s96 = sadd.s32 %s95, 1
      %s97 = scalar_select %p94, %s95, %s96
      %p100 = pneg %p94
      %p101 = scmp.eq.s32.totalorder %s15, 1
      %p102 = por %p100, %p101
      %p103 = scmp.ne.s32.totalorder %s95, %s98
      %p104 = scmp.eq.s32.totalorder %s15, 0
      %p105 = por %p103, %p104
      %p106 = scmp.ne.s32.totalorder %s95, %s98
      %p107 = scmp.eq.s32.totalorder %s20, 1
      %p108 = por %p106, %p107
      %p109 = scmp.ne.s32.totalorder %s98, %s99
      %p110 = scmp.eq.s32.totalorder %s20, 0
      %p111 = por %p109, %p110
      %p112 = scmp.ne.s32.totalorder %s98, %s99
      %p113 = scmp.eq.s32.totalorder %s21, 1
      %p114 = por %p112, %p113
      %p116 = scmp.ne.s32.totalorder %s99, %s115
      %p117 = scmp.eq.s32.totalorder %s21, 0
      %p118 = por %p116, %p117
      %s119 = ssub.s32 %s22, %s34
      %p120 = scmp.eq.s32.totalorder %s119, 0
      %s122 = sadd.s32 %s121, 1
      %s123 = scalar_select %p120, %s121, %s122
      %p126 = pneg %p120
      %p127 = scmp.eq.s32.totalorder %s15, 1
      %p128 = por %p126, %p127
      %p129 = scmp.ne.s32.totalorder %s121, %s124
      %p130 = scmp.eq.s32.totalorder %s15, 0
      %p131 = por %p129, %p130
      %p132 = scmp.ne.s32.totalorder %s121, %s124
      %p133 = scmp.eq.s32.totalorder %s20, 1
      %p134 = por %p132, %p133
      %p135 = scmp.ne.s32.totalorder %s124, %s125
      %p136 = scmp.eq.s32.totalorder %s20, 0
      %p137 = por %p135, %p136
      %p138 = scmp.ne.s32.totalorder %s124, %s125
      %p139 = scmp.eq.s32.totalorder %s21, 1
      %p140 = por %p138, %p139
      %p142 = scmp.ne.s32.totalorder %s125, %s141
      %p143 = scmp.eq.s32.totalorder %s21, 0
      %p144 = por %p142, %p143
      %p145 = scmp.le.s32.totalorder 1, %s15
      %p146 = scmp.lt.s32.totalorder %s15, 3
      %p147 = pnand %p145, %p146
      %p148 = pneg %p147
      // Predicated region
      $region9: #{tpu_custom_call.1} parent=5 // pred_check
        _
      $region10: #{tpu_custom_call.1} parent=5 // pred_check_branch
        %150 = sbr.rel (%p147) target = $region12
      $region11: #{tpu_custom_call.1} parent=5 // pred_region
        %s151 = ssub.s32 %s15, 1
      $region12: #{tpu_custom_call.1} parent=5 // pred_fallthru
        _
      %p152 = scmp.lt.s32.totalorder %s15, 2
      // Predicated region
      $region13: #{tpu_custom_call.1} parent=5 // pred_check
        %p153 = pneg %p152
      $region14: #{tpu_custom_call.1} parent=5 // pred_check_branch
        %155 = sbr.rel (%p153) target = $region16
      $region15: #{tpu_custom_call.1} parent=5 // pred_region
        // Predicated region
        $region17: #{tpu_custom_call.1} parent=15 // pred_check
          %p156 = pneg %p49
        $region18: #{tpu_custom_call.1} parent=15 // pred_check_branch
          %158 = sbr.rel (%p156) target = $region20
        $region19: #{tpu_custom_call.1} parent=15 // pred_region
          %s159 = sand.u32 %s39, 1
          %s160 = scalar_lea.sflag [#allocation7], %s159
          %s161 = sand.u32 %s39, 1
          %s162 = smul.addr %s161, 8
          %s163 = scalar_lea.vmem [#allocation6], %s162
          %s164 = smul.u32 2, %s23
          %s166 = ssub.s32 128, 128
          %167 = vsyncadd %s160, %s166
          %s168 = smul.addr %s22, 2
          %s169 = sadd.s32 %s164, %s168
          %s170 = smul.addr %s169, 64
          %s171 = scalar_lea.hbm %s0, %s170
          %s173 = sshll.u32 %s163, 4
          %s174 = int_to_ptr.vmem [resolvable:$true] %s173
          %176 = dma.hbm_to_vmem [thread:$0]  %s171, 128, %s174, %s160
        $region20: #{tpu_custom_call.1} parent=15 // pred_fallthru
          _
        // Predicated region
        $region21: #{tpu_custom_call.1} parent=15 // pred_check
          %p177 = pneg %p77
        $region22: #{tpu_custom_call.1} parent=15 // pred_check_branch
          %179 = sbr.rel (%p177) target = $region24
        $region23: #{tpu_custom_call.1} parent=15 // pred_region
          %s180 = smul.u32 2, %s23
          %p181 = scmp.lt.s32.totalorder %s22, 1
          %s182 = scalar_select %p181, %s22, 1
          %p183 = scmp.lt.s32.totalorder %s180, 1
          %s184 = scalar_select %p183, %s180, 1
          %s185 = smul.addr %s182, 2
          %s186 = sadd.s32 %s184, %s185
          %s187 = scalar_lea.vmem %s1, %s186
          %s188 = smul.u32 2, %s23
        $region24: #{tpu_custom_call.1} parent=15 // pred_fallthru
          _
        // Predicated region
        $region25: #{tpu_custom_call.1} parent=15 // pred_check
          %p189 = pneg %p105
        $region26: #{tpu_custom_call.1} parent=15 // pred_check_branch
          %191 = sbr.rel (%p189) target = $region28
        $region27: #{tpu_custom_call.1} parent=15 // pred_region
          %s192 = sand.u32 %s95, 1
          %s193 = scalar_lea.sflag [#allocation9], %s192
          %s194 = sand.u32 %s95, 1
          %s195 = smul.addr %s194, 16
          %s196 = scalar_lea.vmem [#allocation8], %s195
          %s197 = smul.u32 2, %s23
          %s199 = ssub.s32 256, 256
          %200 = vsyncadd %s193, %s199
          %s201 = smul.addr %s22, 2
          %s202 = sadd.s32 %s197, %s201
          %s203 = smul.addr %s202, 128
          %s204 = scalar_lea.hbm %s2, %s203
          %s206 = sshll.u32 %s196, 4
          %s207 = int_to_ptr.vmem [resolvable:$true] %s206
          %209 = dma.hbm_to_vmem [thread:$0]  %s204, 256, %s207, %s193
        $region28: #{tpu_custom_call.1} parent=15 // pred_fallthru
          _
      $region16: #{tpu_custom_call.1} parent=5 // pred_fallthru
        _
      %p210 = scmp.le.s32.totalorder 1, %s15
      %p211 = scmp.lt.s32.totalorder %s15, 3
      %p212 = pnand %p210, %p211
      %p213 = pneg %p212
      // Predicated region
      $region29: #{tpu_custom_call.1} parent=5 // pred_check
        _
      $region30: #{tpu_custom_call.1} parent=5 // pred_check_branch
        %215 = sbr.rel (%p212) target = $region32
      $region31: #{tpu_custom_call.1} parent=5 // pred_region
        %s216 = ssub.s32 %s15, 1
        %s217 = sand.u32 %s42, 1
        %s218 = scalar_lea.sflag [#allocation7], %s217
        %s219 = sand.u32 %s42, 1
        %s220 = smul.addr %s219, 8
        %s221 = scalar_lea.vmem [#allocation6], %s220
        // Predicated region
        $region33: #{tpu_custom_call.1} parent=31 // pred_check
          %p222 = pneg %p55
        $region34: #{tpu_custom_call.1} parent=31 // pred_check_branch
          %224 = sbr.rel (%p222) target = $region36
        $region35: #{tpu_custom_call.1} parent=31 // pred_region
          %225 = dma.done %s218, 128
        $region36: #{tpu_custom_call.1} parent=31 // pred_fallthru
          _
        %s226 = sand.u32 %s98, 1
        %s227 = scalar_lea.sflag [#allocation9], %s226
        %s228 = sand.u32 %s98, 1
        %s229 = smul.addr %s228, 16
        %s230 = scalar_lea.vmem [#allocation8], %s229
        // Predicated region
        $region37: #{tpu_custom_call.1} parent=31 // pred_check
          %p231 = pneg %p111
        $region38: #{tpu_custom_call.1} parent=31 // pred_check_branch
          %233 = sbr.rel (%p231) target = $region40
        $region39: #{tpu_custom_call.1} parent=31 // pred_region
          %234 = dma.done %s227, 256
        $region40: #{tpu_custom_call.1} parent=31 // pred_fallthru
          _
        %s235 = sand.u32 %s42, 1
        %s236 = scalar_lea.sflag [#allocation7], %s235
        %s237 = sand.u32 %s42, 1
        %s238 = smul.addr %s237, 8
        %s239 = scalar_lea.vmem [#allocation6], %s238
        %p240 = pneg %p55
        %p241 = pneg %p52
        %s242 = smul.u32 2, %s25
        %p243 = scmp.lt.s32.totalorder %s24, 1
        %s244 = scalar_select %p243, %s24, 1
        %p245 = scmp.lt.s32.totalorder %s242, 1
        %s246 = scalar_select %p245, %s242, 1
        %s247 = smul.addr %s244, 2
        %s248 = sadd.s32 %s246, %s247
        %s249 = scalar_lea.vmem %s1, %s248
        %p250 = pneg %p83
        %p251 = pneg %p80
        %s252 = sand.u32 %s98, 1
        %s253 = scalar_lea.sflag [#allocation9], %s252
        %s254 = sand.u32 %s98, 1
        %s255 = smul.addr %s254, 16
        %s256 = scalar_lea.vmem [#allocation8], %s255
        %p257 = pneg %p111
        %p258 = pneg %p108
        %p259 = pneg %p137
        %p260 = pneg %p134
        %p261 = scmp.lt.s32.totalorder %s24, 1
        %s262 = scalar_select %p261, %s24, 1
        %s263 = scalar_lea.vmem %s3, %s262
        %s264 = smul.u32 2, %s25
        %s265 = smul.u32 2, %s25
        %p266 = scmp.lt.s32.totalorder %s24, 1
        %s267 = scalar_select %p266, %s24, 1
        %p268 = scmp.lt.s32.totalorder %s265, 1
        %s269 = scalar_select %p268, %s265, 1
        %s270 = smul.addr %s267, 2
        %s271 = sadd.s32 %s269, %s270
        %s272 = scalar_lea.vmem %s1, %s271
        %s273 = smul.u32 2, %s25
        %s274 = smul.u32 2, %s25
        %p275 = scmp.lt.s32.totalorder %s24, 1
        %s276 = scalar_select %p275, %s24, 1
        %s277 = scalar_lea.vmem %s3, %s276
        %v278 = vld [vmem:[%s221] sm:$0xff]
        %v279 = vld [vmem:[%s272] sm:$0x3]
        %v280 = vunpack.c.0.s8 %v279
        %v281 = vld [vmem:[%s230] sm:$0xff]
        %v282 = vld [vmem:[%s230 + $0x8] sm:$0xff]
        %p283 = scmp.eq.s32.totalorder %s25, 0
        // Predicated region
        $region41: #{tpu_custom_call.1} parent=31 // pred_check
          %p284 = pneg %p283
        $region42: #{tpu_custom_call.1} parent=31 // pred_check_branch
          %286 = sbr.rel (%p284) target = $region44
        $region43: #{tpu_custom_call.1} parent=31 // pred_region
          %v287 = vlaneseq
          %vm288 = vcmp.ge.s32.totalorder %v287, 0
          %vm289 = vcmp.lt.s32.totalorder %v287, 256
          %vm290 = vmand %vm288, %vm289
          %291 = vst.msk [vmem:[#allocation2] sm:$0x3] %vm290, 0.0
          %v292 = vlaneseq
          %v293 = vand.u32 %v292, 127
          %v294 = vadd.s32 %v293, 128
          %vm295 = vcmp.lt.s32.totalorder %v293, 0
          %v296 = vsub.s32 0, %v293
          %v297 = vsel %vm295, %v296, %v293
          %v298 = vshrl.u32 %v297, 4
          %v299 = vand.u32 %v297, 15
          %v300 = vsub.s32 0, %v299
          %v301 = vsel %vm295, %v300, %v299
          %vm302 = vcmp.lt.s32.totalorder %v294, 0
          %v303 = vsub.s32 0, %v294
          %v304 = vsel %vm302, %v303, %v294
          %v305 = vshrl.u32 %v304, 4
          %v306 = vand.u32 %v304, 15
          %v307 = vsub.s32 0, %v306
          %v308 = vsel %vm302, %v307, %v306
          %vm309 = vcmp.ne.s32.totalorder %v301, 0
          %vm310 = vcmp.ne.s32.totalorder %v308, 0
          %vm311 = vcmp.lt.s32.totalorder %v301, 0
          %vm312 = vcmp.lt.s32.totalorder %v308, 0
          %vm313 = vmand %vm311, %vm309
          %vm314 = vmand %vm312, %vm310
          %v315 = vadd.s32 %v301, 16
          %v316 = vadd.s32 %v308, 16
          %v317 = vsel %vm313, %v315, %v301
          %v318 = vsel %vm314, %v316, %v308
          %vm319 = vcmp.ne.s32.totalorder %v317, 0
          %vm320 = vcmp.ne.s32.totalorder %v318, 0
          %v321 = vsel %vm319, 2.6041667e-05, 0.0
          %v322 = vsel %vm320, 2.6041667e-05, 0.0
          %v325 = vcombine.low %v321, %v322
          %v327 = vunpack.c.l.s4 1966171168
          %v328 = vunpack.c.0.s8 %v327
          %v329 = vlaneseq
          %v330 = vshrl.u32 %v329, 7
          %v331 = vsub.s32 %v328, %v330
          %v332 = vrot.slane %v325, %v331
          %v334 = vunpack.c.l.s4 1966171168
          %v335 = vunpack.c.0.s8 %v334
          %v336 = vlaneseq
          %v337 = vshrl.u32 %v336, 7
          %v338 = vsub.s32 %v335, %v337
          %v339 = vrot.slane %v332, %v338
          %341 = vst.msk [vmem:[#allocation3] sm:$0x3] %vm290, %v339
          %vm342 = vcmp.ge.s32.totalorder %v293, 16
          %vm343 = vcmp.ge.s32.totalorder %v294, 16
          %v344 = vsel %vm342, 2.6041667e-05, 0.0
          %v345 = vsel %vm343, 2.6041667e-05, 0.0
          %v348 = vcombine.low %v344, %v345
          %v350 = vunpack.c.l.s4 1966171168
          %v351 = vunpack.c.0.s8 %v350
          %v352 = vlaneseq
          %v353 = vshrl.u32 %v352, 7
          %v354 = vsub.s32 %v351, %v353
          %v355 = vrot.slane %v348, %v354
          %v357 = vunpack.c.l.s4 1966171168
          %v358 = vunpack.c.0.s8 %v357
          %v359 = vlaneseq
          %v360 = vshrl.u32 %v359, 7
          %v361 = vsub.s32 %v358, %v360
          %v362 = vrot.slane %v355, %v361
          %364 = vst.msk [vmem:[#allocation4] sm:$0x3] %vm290, %v362
        $region44: #{tpu_custom_call.1} parent=31 // pred_fallthru
          _
        %v365 = vlaneseq
        %v366 = vshrl.u32 %v365, 7
        %v367 = vlaneseq
        %v368 = vshrl.u32 %v367, 7
        %v369 = vsub.s32 0, %v368
        %v370 = vrot.slane %v280, %v369
        %v371 = vlaneseq
        %v372 = vshrl.u32 %v371, 7
        %v373 = vsub.s32 4, %v372
        %v374 = vrot.slane %v280, %v373
        %v375 = vlaneseq
        %v376 = vshrl.u32 %v375, 7
        %v377 = vsub.s32 0, %v376
        %v378 = vrot.slane %v370, %v377
        %v379 = vlaneseq
        %v380 = vshrl.u32 %v379, 7
        %v381 = vsub.s32 0, %v380
        %v382 = vrot.slane %v374, %v381
        %vm383 = vcmp.eq.s32.totalorder %v366, %v378
        %vm384 = vcmp.eq.s32.totalorder %v366, %v382
        %v386 = vcombine.high %v278, %v278
        %v388 = vsel %vm383, %v278, 0.0
        %v389 = vsel %vm384, %v386, 0.0
        %vm390 = vcmask 1043456
        %v391 = vsel %vm390, %v388, 0.0
        %v392 = vrot.slane %v391, 4
        %v393 = vadd.f32 %v391, %v392
        %v394 = vrot.slane %v393, 2
        %v395 = vadd.f32 %v393, %v394
        %v396 = vrot.slane %v395, 1
        %v397 = vadd.f32 %v395, %v396
        %v398 = vsel %vm390, %v389, 0.0
        %v399 = vrot.slane %v398, 4
        %v400 = vadd.f32 %v398, %v399
        %v401 = vrot.slane %v400, 2
        %v402 = vadd.f32 %v400, %v401
        %v403 = vrot.slane %v402, 1
        %v404 = vadd.f32 %v402, %v403
        %v405 = vsel %vm390, %v278, -inf
        %v406 = vrot.slane %v405, 4
        %v407 = vmax.f32 %v405, %v406
        %v408 = vrot.slane %v407, 2
        %v409 = vmax.f32 %v407, %v408
        %v410 = vrot.slane %v409, 1
        %v411 = vmax.f32 %v409, %v410
        %v412 = vsel %vm390, %v386, -inf
        %v413 = vrot.slane %v412, 4
        %v414 = vmax.f32 %v412, %v413
        %v415 = vrot.slane %v414, 2
        %v416 = vmax.f32 %v414, %v415
        %v417 = vrot.slane %v416, 1
        %v418 = vmax.f32 %v416, %v417
        %v421 = vcombine.low %v411, %v418
        %v423 = vsub.f32 %v278, %v421
        %v424 = vmul.f32 %v423, 1.442695
        %v425 = vpow.pop %v424
        %v427 = vcombine.high %v425, %v425
        %v429 = vsel %vm390, %v425, 0.0
        %v430 = vrot.slane %v429, 4
        %v431 = vadd.f32 %v429, %v430
        %v432 = vrot.slane %v431, 2
        %v433 = vadd.f32 %v431, %v432
        %v434 = vrot.slane %v433, 1
        %v435 = vadd.f32 %v433, %v434
        %v436 = vsel %vm390, %v427, 0.0
        %v437 = vrot.slane %v436, 4
        %v438 = vadd.f32 %v436, %v437
        %v439 = vrot.slane %v438, 2
        %v440 = vadd.f32 %v438, %v439
        %v441 = vrot.slane %v440, 1
        %v442 = vadd.f32 %v440, %v441
        %v443 = vlog2.pop %v435
        %v444 = vmul.f32 %v443, 0.6931472
        %v445 = vlog2.pop %v442
        %v446 = vmul.f32 %v445, 0.6931472
        %v447 = vadd.f32 %v444, %v411
        %v448 = vadd.f32 %v446, %v418
        %449 = vrot.lane.b32.xlu0 %v281, 1
        %v450 = vpop.permute.xlu0 %449
        %451 = vrot.lane.b32.xlu0 %v282, 1
        %v452 = vpop.permute.xlu0 %451
        %v453 = vlaneseq
        %v454 = vand.u32 %v453, 127
        %vm455 = vcmp.lt.s32.totalorder %v454, 1
        %v456 = vsel %vm455, %v450, %v452
        %v457 = vsel %vm455, %v452, %v450
        %458 = vrot.lane.b32.xlu0 %v281, 16
        %v459 = vpop.permute.xlu0 %458
        %460 = vrot.lane.b32.xlu0 %v282, 16
        %v461 = vpop.permute.xlu0 %460
        %vm462 = vcmp.lt.s32.totalorder %v454, 16
        %v463 = vsel %vm462, %v459, %v461
        %v464 = vsel %vm462, %v461, %v459
        %v465 = vsub.f32 %v281, %v457
        %v466 = vsub.f32 %v282, %v456
        %v467 = vand.u32 2147483647, %v465
        %v468 = vand.u32 2147483647, %v466
        %v469 = vrot.slane %v467, 4
        %v470 = vadd.f32 %v467, %v469
        %v471 = vrot.slane %v470, 2
        %v472 = vadd.f32 %v470, %v471
        %v473 = vrot.slane %v472, 1
        %v474 = vadd.f32 %v472, %v473
        %v475 = vrot.slane %v468, 4
        %v476 = vadd.f32 %v468, %v475
        %v477 = vrot.slane %v476, 2
        %v478 = vadd.f32 %v476, %v477
        %v479 = vrot.slane %v478, 1
        %v480 = vadd.f32 %v478, %v479
        %v481 = vsub.f32 %v281, %v464
        %v482 = vsub.f32 %v282, %v463
        %v483 = vand.u32 2147483647, %v481
        %v484 = vand.u32 2147483647, %v482
        %v485 = vrot.slane %v483, 4
        %v486 = vadd.f32 %v483, %v485
        %v487 = vrot.slane %v486, 2
        %v488 = vadd.f32 %v486, %v487
        %v489 = vrot.slane %v488, 1
        %v490 = vadd.f32 %v488, %v489
        %v491 = vrot.slane %v484, 4
        %v492 = vadd.f32 %v484, %v491
        %v493 = vrot.slane %v492, 2
        %v494 = vadd.f32 %v492, %v493
        %v495 = vrot.slane %v494, 1
        %v496 = vadd.f32 %v494, %v495
        %v497 = vsub.f32 %v447, %v397
        %v498 = vsub.f32 %v448, %v404
        %v499 = vmul.f32 %v497, 0.001953125
        %v500 = vmul.f32 %v498, 0.001953125
        %v501 = vld [vmem:[#allocation3] sm:$0x3]
        %v504 = vcombine.low %v474, %v480
        %v506 = vunpack.c.l.s4 1966171168
        %v507 = vunpack.c.0.s8 %v506
        %v508 = vlaneseq
        %v509 = vshrl.u32 %v508, 7
        %v510 = vsub.s32 %v507, %v509
        %v511 = vrot.slane %v504, %v510
        %v513 = vunpack.c.l.s4 1966171168
        %v514 = vunpack.c.0.s8 %v513
        %v515 = vlaneseq
        %v516 = vshrl.u32 %v515, 7
        %v517 = vsub.s32 %v514, %v516
        %v518 = vrot.slane %v511, %v517
        %v520 = vmul.f32 %v501, %v518
        %v522 = vlaneseq
        %v523 = vshrl.u32 %v522, 7
        %v524 = vsub.s32 0, %v523
        %v525 = vrot.slane %v520, %v524
        %v526 = vlaneseq
        %v527 = vshrl.u32 %v526, 7
        %v528 = vsub.s32 1, %v527
        %v529 = vrot.slane %v520, %v528
        %v532 = vadd.f32 %v499, %v525
        %v533 = vadd.f32 %v500, %v529
        %v534 = vld [vmem:[#allocation4] sm:$0x3]
        %v537 = vcombine.low %v490, %v496
        %v539 = vunpack.c.l.s4 1966171168
        %v540 = vunpack.c.0.s8 %v539
        %v541 = vlaneseq
        %v542 = vshrl.u32 %v541, 7
        %v543 = vsub.s32 %v540, %v542
        %v544 = vrot.slane %v537, %v543
        %v546 = vunpack.c.l.s4 1966171168
        %v547 = vunpack.c.0.s8 %v546
        %v548 = vlaneseq
        %v549 = vshrl.u32 %v548, 7
        %v550 = vsub.s32 %v547, %v549
        %v551 = vrot.slane %v544, %v550
        %v553 = vmul.f32 %v534, %v551
        %v555 = vlaneseq
        %v556 = vshrl.u32 %v555, 7
        %v557 = vsub.s32 0, %v556
        %v558 = vrot.slane %v553, %v557
        %v559 = vlaneseq
        %v560 = vshrl.u32 %v559, 7
        %v561 = vsub.s32 1, %v560
        %v562 = vrot.slane %v553, %v561
        %v565 = vadd.f32 %v532, %v558
        %v566 = vadd.f32 %v533, %v562
        %v567 = vld [vmem:[#allocation2] sm:$0x3]
        %v570 = vcombine.low %v565, %v566
        %v572 = vunpack.c.l.s4 1966171168
        %v573 = vunpack.c.0.s8 %v572
        %v574 = vlaneseq
        %v575 = vshrl.u32 %v574, 7
        %v576 = vsub.s32 %v573, %v575
        %v577 = vrot.slane %v570, %v576
        %v579 = vunpack.c.l.s4 1966171168
        %v580 = vunpack.c.0.s8 %v579
        %v581 = vlaneseq
        %v582 = vshrl.u32 %v581, 7
        %v583 = vsub.s32 %v580, %v582
        %v584 = vrot.slane %v577, %v583
        %v586 = vadd.f32 %v567, %v584
        %v587 = vlaneseq
        %vm588 = vcmp.ge.s32.totalorder %v587, 0
        %vm589 = vcmp.lt.s32.totalorder %v587, 256
        %vm590 = vmand %vm588, %vm589
        %591 = vst.msk [vmem:[#allocation2] sm:$0x3] %vm590, %v586
        // Predicated region
        $region45: #{tpu_custom_call.1} parent=31 // pred_check
          %p592 = pneg %p283
        $region46: #{tpu_custom_call.1} parent=31 // pred_check_branch
          %594 = sbr.rel (%p592) target = $region48
        $region47: #{tpu_custom_call.1} parent=31 // pred_region
          %v595 = vld [vmem:[#allocation2] sm:$0x3]
          %v597 = vlaneseq
          %v598 = vshrl.u32 %v597, 7
          %v599 = vsub.s32 0, %v598
          %v600 = vrot.slane %v595, %v599
          %v601 = vlaneseq
          %v602 = vshrl.u32 %v601, 7
          %v603 = vsub.s32 1, %v602
          %v604 = vrot.slane %v595, %v603
          %vm607 = vcmask 1040384
          %v608 = vsel %vm607, %v600, 0.0
          %v609 = vsel %vm607, %v604, 0.0
          %v610 = vadd.f32 %v608, %v609
          %611 = vadd.xlane.f32.xlu0 %v610
          %v612 = vpop.xlane.xlu0 %611
          %vm613 = vcmask 0
          %614 = vst.msk [vmem:[%s277] sm:$0x1] %vm613, %v612
        $region48: #{tpu_custom_call.1} parent=31 // pred_fallthru
          _
        %p615 = scmp.lt.s32.totalorder %s24, 1
        %s616 = scalar_select %p615, %s24, 1
        %s617 = scalar_lea.vmem %s3, %s616
        // Predicated region
        $region49: #{tpu_custom_call.1} parent=31 // pred_check
          %p618 = pneg %p134
        $region50: #{tpu_custom_call.1} parent=31 // pred_check_branch
          %620 = sbr.rel (%p618) target = $region52
        $region51: #{tpu_custom_call.1} parent=31 // pred_region
          _
        $region52: #{tpu_custom_call.1} parent=31 // pred_fallthru
          _
      $region32: #{tpu_custom_call.1} parent=5 // pred_fallthru
        _
      %p621 = scmp.le.s32.totalorder 2, %s15
      // Predicated region
      $region53: #{tpu_custom_call.1} parent=5 // pred_check
        %p622 = pneg %p621
      $region54: #{tpu_custom_call.1} parent=5 // pred_check_branch
        %624 = sbr.rel (%p622) target = $region56
      $region55: #{tpu_custom_call.1} parent=5 // pred_region
        %s625 = ssub.s32 %s15, 2
        // Predicated region
        $region57: #{tpu_custom_call.1} parent=55 // pred_check
          %p626 = pneg %p140
        $region58: #{tpu_custom_call.1} parent=55 // pred_check_branch
          %628 = sbr.rel (%p626) target = $region60
        $region59: #{tpu_custom_call.1} parent=55 // pred_region
          %p629 = scmp.lt.s32.totalorder %s26, 1
          %s630 = scalar_select %p629, %s26, 1
          %s631 = scalar_lea.vmem %s3, %s630
        $region60: #{tpu_custom_call.1} parent=55 // pred_fallthru
          _
      $region56: #{tpu_custom_call.1} parent=5 // pred_fallthru
        _
    $region6: #{tpu_custom_call.1} parent=1 // loop_footer
      %s19 = sadd.s32 1, %s15
    $region7: #{tpu_custom_call.1} parent=1 // loop_footer_branch
      %14 = sbr.rel target = $region3
    $region8: #{tpu_custom_call.1} parent=1 // loop_exit
      _
    %632 = vsyncpa [#allocation7], 1
    %s633 = scalar_lea.sflag [#allocation7], 1
    %634 = vsyncpa %s633, 1
    %635 = vsyncpa [#allocation9], 1
    %s636 = scalar_lea.sflag [#allocation9], 1
    %637 = vsyncpa %s636, 1

</llo_original>
